<compile_context>
chip_gen: v6e
topology: v6e:2x2x1
jax: 0.10.0
libtpu: 0.0.40
codegen_flags: <defaults>
</compile_context>

<pallas_src>
import jax
import jax.numpy as jnp
from jax.experimental import pallas as pl
from jax.experimental.pallas import tpu as pltpu

HIDDEN = 16  # fixed by the PyTorch module


def _round_up(n: int, m: int) -> int:
    return ((n + m - 1) // m) * m


def densenet_kernel(x_ref, w1_ref, b1_ref, w2_ref, b2_ref,
                    w3_ref, b3_ref, wh_ref, bh_ref, o_ref):
    """One batch tile of the fused 4-layer MLP.

    MXU operands are in the weights' dtype (f32 or bf16); accumulation,
    bias adds and ReLUs stay in f32.
    """
    w_dtype = w1_ref.dtype
    x = x_ref[...]  # already in compute dtype (cast in the wrapper if needed)

    h = jnp.dot(x, w1_ref[...], preferred_element_type=jnp.float32) + b1_ref[...]
    h = jnp.maximum(h, 0.0).astype(w_dtype)

    h = jnp.dot(h, w2_ref[...], preferred_element_type=jnp.float32) + b2_ref[...]
    h = jnp.maximum(h, 0.0).astype(w_dtype)

    h = jnp.dot(h, w3_ref[...], preferred_element_type=jnp.float32) + b3_ref[...]
    h = jnp.maximum(h, 0.0).astype(w_dtype)

    out = jnp.dot(h, wh_ref[...], preferred_element_type=jnp.float32) + bh_ref[...]
    o_ref[...] = out.astype(o_ref.dtype)


def _choose_batch_tiling(batch, sub, tile_b_max, min_grid_steps):
    """Pick (tile_b, batch_padded, n_steps).

    - tile_b is a multiple of `sub` (8 for f32, 16 for bf16 packing).
    - Prefer >= min_grid_steps grid steps (megacore sharding on v7x) when the
      batch is large enough for more than one sub-multiple tile.
    - Derive tile_b from cdiv(batch, steps) so padding stays minimal (avoids
      e.g. batch=1025 silently doubling work against a fixed 1024 tile).
    """
    bp = _round_up(batch, sub)
    steps = pl.cdiv(bp, tile_b_max)
    if bp >= min_grid_steps * sub:
        steps = max(steps, min_grid_steps)
    tile_b = _round_up(pl.cdiv(bp, steps), sub)
    steps = pl.cdiv(bp, tile_b)
    return tile_b, tile_b * steps, steps


def densenet_forward(x, params, *, compute_dtype=jnp.float32,
                     out_dtype=jnp.float32, tile_b_max=8192,
                     min_grid_steps=2):
    """x: [batch, in_features]; params: dict of weights/biases.

    compute_dtype: dtype of the MXU operands (jnp.float32 or jnp.bfloat16;
                   bf16 is valid on v5e/v6e/v7x — VPU work stays f32).
    out_dtype:     dtype of the HBM output (f32 default; bf16 halves the
                   write stream if the caller tolerates one final rounding).
    """
    batch, in_features = x.shape
    hidden = params["w1"].shape[1]
    out_dim = params["wh"].shape[1]

    # --- batch tiling (double-buffered x/out blocks, resident weights) ------
    sub = 16 if compute_dtype == jnp.bfloat16 else 8
    tile_b, batch_padded, n_steps = _choose_batch_tiling(
        batch, sub, tile_b_max, min_grid_steps)

    if batch_padded != batch:
        # Padded rows are zeros -> only bias garbage in the output; sliced off.
        x = jnp.pad(x, ((0, batch_padded - batch), (0, 0)))

    if x.dtype != compute_dtype:
        x = x.astype(compute_dtype)
    w1 = params["w1"].astype(compute_dtype)
    w2 = params["w2"].astype(compute_dtype)
    w3 = params["w3"].astype(compute_dtype)
    wh = params["wh"].astype(compute_dtype)
    # Biases stay f32: bias add + ReLU run on the VPU in f32 on every chip.
    b1 = params["b1"].astype(jnp.float32)
    b2 = params["b2"].astype(jnp.float32)
    b3 = params["b3"].astype(jnp.float32)
    bh = params["bh"].astype(jnp.float32)

    grid = (n_steps,)

    def const_spec(shape):
        # Same block every grid step -> DMA'd once, stays resident in VMEM.
        return pl.BlockSpec(shape, lambda i: (0, 0))

    flops = 2 * batch_padded * (in_features * hidden
                                + 2 * hidden * hidden
                                + hidden * out_dim)
    bytes_accessed = (
        batch_padded * in_features * jnp.dtype(compute_dtype).itemsize
        + sum(int(a.size) * a.dtype.itemsize
              for a in (w1, b1, w2, b2, w3, b3, wh, bh))
        + batch_padded * out_dim * jnp.dtype(out_dtype).itemsize)

    out = pl.pallas_call(
        densenet_kernel,
        out_shape=jax.ShapeDtypeStruct((batch_padded, out_dim), out_dtype),
        grid=grid,
        in_specs=[
            pl.BlockSpec((tile_b, in_features), lambda i: (i, 0)),  # x tile
            const_spec((in_features, hidden)),   # w1
            const_spec((1, hidden)),             # b1
            const_spec((hidden, hidden)),        # w2
            const_spec((1, hidden)),             # b2
            const_spec((hidden, hidden)),        # w3
            const_spec((1, hidden)),             # b3
            const_spec((hidden, out_dim)),       # wh (unpadded)
            const_spec((1, out_dim)),            # bh (unpadded)
        ],
        out_specs=pl.BlockSpec((tile_b, out_dim), lambda i: (i, 0)),
        compiler_params=pltpu.CompilerParams(
            dimension_semantics=("parallel",),   # megacore sharding on v7x
        ),
        cost_estimate=pl.CostEstimate(
            flops=int(flops), transcendentals=0,
            bytes_accessed=int(bytes_accessed)),
    )(x, w1, b1, w2, b2, w3, b3, wh, bh)

    # Only slice when the batch was actually padded (batch-dim only; lanes are
    # already unpadded so there is no full-output copy in the common case).
    if batch_padded != batch:
        out = out[:batch]
    return out


def init_params(key, in_features, output_size):
    """Deterministic synthetic init (uniform like torch Linear default)."""
    dims = [(in_features, HIDDEN), (HIDDEN, HIDDEN), (HIDDEN, HIDDEN),
            (HIDDEN, output_size)]
    names = ["1", "2", "3", "h"]
    params = {}
    for name, (fan_in, fan_out) in zip(names, dims):
        key, kw, kb = jax.random.split(key, 3)
        bound = 1.0 / jnp.sqrt(jnp.float32(fan_in))
        params[f"w{name}"] = jax.random.uniform(
            kw, (fan_in, fan_out), jnp.float32, -bound, bound)
        # bias kept 2D [1, out] so it stays a clean (sublane, lane) tile in VMEM
        params[f"b{name}"] = jax.random.uniform(
            kb, (1, fan_out), jnp.float32, -bound, bound)
    return params


def densenet_ref(x, params):
    """Pure-JAX reference for correctness check."""
    h = jax.nn.relu(x @ params["w1"] + params["b1"])
    h = jax.nn.relu(h @ params["w2"] + params["b2"])
    h = jax.nn.relu(h @ params["w3"] + params["b3"])
    return h @ params["wh"] + params["bh"]


# TODO(synk): hidden=16 uses <13% of MXU lanes; packing several independent
# nets side-by-side would be nearly free, but the module spec fixes hidden=16.

if __name__ == "__main__":
    key = jax.random.PRNGKey(0)
    key, kx, kp = jax.random.split(key, 3)

    batch, in_features, output_size = 8, 32, 8
    x = jax.random.normal(kx, (batch, in_features), jnp.float32)
    params = init_params(kp, in_features, output_size)

    ref = densenet_ref(x, params)

    # f32 path: exact match against the pure-JAX reference (single grid step,
    # no batch padding, no post-kernel copy).
    out = jax.block_until_ready(densenet_forward(x, params))
    assert out.shape == (batch, output_size)
    assert jnp.allclose(out, ref, atol=1e-5, rtol=1e-5)

    # bf16 MXU-operand path (valid on v5e/v6e/v7x): x and activations are
    # rounded to bf16, accumulation stays f32 -> looser tolerance.
    out_bf16 = jax.block_until_ready(
        densenet_forward(x, params, compute_dtype=jnp.bfloat16))
    assert out_bf16.shape == (batch, output_size)
    assert jnp.allclose(out_bf16, ref, atol=5e-2, rtol=5e-2)

    # Multi-tile grid + ragged batch (batch not a multiple of the tile size).
    key, kx2 = jax.random.split(key)
    batch2 = 40
    x2 = jax.random.normal(kx2, (batch2, in_features), jnp.float32)
    out2 = jax.block_until_ready(
        densenet_forward(x2, params, tile_b_max=16, min_grid_steps=2))
    assert out2.shape == (batch2, output_size)
    assert jnp.allclose(out2, densenet_ref(x2, params), atol=1e-5, rtol=1e-5)

    # Larger batch: confirms >= 2 parallel grid steps (v7x megacore) and the
    # big-tile path, still with an exact f32 match.
    key, kx3 = jax.random.split(key)
    batch3 = 4096
    x3 = jax.random.normal(kx3, (batch3, in_features), jnp.float32)
    out3 = jax.block_until_ready(densenet_forward(x3, params))
    assert out3.shape == (batch3, output_size)
    assert jnp.allclose(out3, densenet_ref(x3, params), atol=1e-5, rtol=1e-5)

    print("KERNEL_OK")
</pallas_src>

<mosaic_0001>
module attributes {stable_mosaic.version = 11 : i64} {
  func.func @densenet_kernel(%arg0: i32, %arg1: memref<8x32xf32, #tpu.memory_space<vmem>>, %arg2: memref<32x16xf32, #tpu.memory_space<vmem>>, %arg3: memref<1x16xf32, #tpu.memory_space<vmem>>, %arg4: memref<16x16xf32, #tpu.memory_space<vmem>>, %arg5: memref<1x16xf32, #tpu.memory_space<vmem>>, %arg6: memref<16x16xf32, #tpu.memory_space<vmem>>, %arg7: memref<1x16xf32, #tpu.memory_space<vmem>>, %arg8: memref<16x8xf32, #tpu.memory_space<vmem>>, %arg9: memref<1x8xf32, #tpu.memory_space<vmem>>, %arg10: memref<8x8xf32, #tpu.memory_space<vmem>>) attributes {dimension_semantics = [#tpu.dimension_semantics<parallel>], iteration_bounds = array<i64: 1>, scalar_prefetch = 0 : i64, scratch_operands = 0 : i64, tpu.core_type = #tpu.core_type<tc>, window_params = [{transform_indices = @transform_0, window_bounds = array<i64: 8, 32>}, {pipeline_mode = #tpu.pipeline_mode<synchronous>, transform_indices = @transform_1, window_bounds = array<i64: 32, 16>}, {pipeline_mode = #tpu.pipeline_mode<synchronous>, transform_indices = @transform_2, window_bounds = array<i64: 1, 16>}, {pipeline_mode = #tpu.pipeline_mode<synchronous>, transform_indices = @transform_3, window_bounds = array<i64: 16, 16>}, {pipeline_mode = #tpu.pipeline_mode<synchronous>, transform_indices = @transform_4, window_bounds = array<i64: 1, 16>}, {pipeline_mode = #tpu.pipeline_mode<synchronous>, transform_indices = @transform_5, window_bounds = array<i64: 16, 16>}, {pipeline_mode = #tpu.pipeline_mode<synchronous>, transform_indices = @transform_6, window_bounds = array<i64: 1, 16>}, {pipeline_mode = #tpu.pipeline_mode<synchronous>, transform_indices = @transform_7, window_bounds = array<i64: 16, 8>}, {pipeline_mode = #tpu.pipeline_mode<synchronous>, transform_indices = @transform_8, window_bounds = array<i64: 1, 8>}, {transform_indices = @transform_9, window_bounds = array<i64: 8, 8>}]} {
    %c0 = arith.constant 0 : index
    %c0_0 = arith.constant 0 : index
    %0 = vector.load %arg1[%c0, %c0_0] : memref<8x32xf32, #tpu.memory_space<vmem>>, vector<8x32xf32>
    %c0_1 = arith.constant 0 : index
    %c0_2 = arith.constant 0 : index
    %1 = vector.load %arg2[%c0_1, %c0_2] : memref<32x16xf32, #tpu.memory_space<vmem>>, vector<32x16xf32>
    %cst = arith.constant dense<0.000000e+00> : vector<8x16xf32>
    %2 = tpu.matmul %0, %1, %cst {dimension_numbers = #tpu.dot_dimension_numbers<[1], [0], [0], [1], [0, 0, 1, 1], [], []>} : vector<8x32xf32>, vector<32x16xf32>, vector<8x16xf32> -> vector<8x16xf32>
    %c0_3 = arith.constant 0 : index
    %c0_4 = arith.constant 0 : index
    %3 = vector.load %arg3[%c0_3, %c0_4] : memref<1x16xf32, #tpu.memory_space<vmem>>, vector<1x16xf32>
    %4 = vector.broadcast %3 : vector<1x16xf32> to vector<8x16xf32>
    %5 = arith.addf %2, %4 : vector<8x16xf32>
    %cst_5 = arith.constant 0.000000e+00 : f32
    %6 = vector.broadcast %cst_5 : f32 to vector<8x16xf32>
    %7 = arith.maximumf %5, %6 : vector<8x16xf32>
    %c0_6 = arith.constant 0 : index
    %c0_7 = arith.constant 0 : index
    %8 = vector.load %arg4[%c0_6, %c0_7] : memref<16x16xf32, #tpu.memory_space<vmem>>, vector<16x16xf32>
    %cst_8 = arith.constant dense<0.000000e+00> : vector<8x16xf32>
    %9 = tpu.matmul %7, %8, %cst_8 {dimension_numbers = #tpu.dot_dimension_numbers<[1], [0], [0], [1], [0, 0, 1, 1], [], []>} : vector<8x16xf32>, vector<16x16xf32>, vector<8x16xf32> -> vector<8x16xf32>
    %c0_9 = arith.constant 0 : index
    %c0_10 = arith.constant 0 : index
    %10 = vector.load %arg5[%c0_9, %c0_10] : memref<1x16xf32, #tpu.memory_space<vmem>>, vector<1x16xf32>
    %11 = vector.broadcast %10 : vector<1x16xf32> to vector<8x16xf32>
    %12 = arith.addf %9, %11 : vector<8x16xf32>
    %cst_11 = arith.constant 0.000000e+00 : f32
    %13 = vector.broadcast %cst_11 : f32 to vector<8x16xf32>
    %14 = arith.maximumf %12, %13 : vector<8x16xf32>
    %c0_12 = arith.constant 0 : index
    %c0_13 = arith.constant 0 : index
    %15 = vector.load %arg6[%c0_12, %c0_13] : memref<16x16xf32, #tpu.memory_space<vmem>>, vector<16x16xf32>
    %cst_14 = arith.constant dense<0.000000e+00> : vector<8x16xf32>
    %16 = tpu.matmul %14, %15, %cst_14 {dimension_numbers = #tpu.dot_dimension_numbers<[1], [0], [0], [1], [0, 0, 1, 1], [], []>} : vector<8x16xf32>, vector<16x16xf32>, vector<8x16xf32> -> vector<8x16xf32>
    %c0_15 = arith.constant 0 : index
    %c0_16 = arith.constant 0 : index
    %17 = vector.load %arg7[%c0_15, %c0_16] : memref<1x16xf32, #tpu.memory_space<vmem>>, vector<1x16xf32>
    %18 = vector.broadcast %17 : vector<1x16xf32> to vector<8x16xf32>
    %19 = arith.addf %16, %18 : vector<8x16xf32>
    %cst_17 = arith.constant 0.000000e+00 : f32
    %20 = vector.broadcast %cst_17 : f32 to vector<8x16xf32>
    %21 = arith.maximumf %19, %20 : vector<8x16xf32>
    %c0_18 = arith.constant 0 : index
    %c0_19 = arith.constant 0 : index
    %22 = vector.load %arg8[%c0_18, %c0_19] : memref<16x8xf32, #tpu.memory_space<vmem>>, vector<16x8xf32>
    %cst_20 = arith.constant dense<0.000000e+00> : vector<8x8xf32>
    %23 = tpu.matmul %21, %22, %cst_20 {dimension_numbers = #tpu.dot_dimension_numbers<[1], [0], [0], [1], [0, 0, 1, 1], [], []>} : vector<8x16xf32>, vector<16x8xf32>, vector<8x8xf32> -> vector<8x8xf32>
    %c0_21 = arith.constant 0 : index
    %c0_22 = arith.constant 0 : index
    %24 = vector.load %arg9[%c0_21, %c0_22] : memref<1x8xf32, #tpu.memory_space<vmem>>, vector<1x8xf32>
    %25 = vector.broadcast %24 : vector<1x8xf32> to vector<8x8xf32>
    %26 = arith.addf %23, %25 : vector<8x8xf32>
    %c0_23 = arith.constant 0 : index
    %c0_24 = arith.constant 0 : index
    %27 = vector.load %arg10[%c0_23, %c0_24] : memref<8x8xf32, #tpu.memory_space<vmem>>, vector<8x8xf32>
    tpu.vector_store %arg10[%c0_23, %c0_24], %26 {strides = array<i32>} : memref<8x8xf32, #tpu.memory_space<vmem>>, vector<8x8xf32>,
    return
  }
  func.func @transform_0(%arg0: i32) -> (i32, i32) {
    %c0_i32 = arith.constant 0 : i32
    %c0_i32_0 = arith.constant 0 : i32
    return %arg0, %c0_i32 : i32, i32
  }
  func.func @transform_1(%arg0: i32) -> (i32, i32) {
    %c0_i32 = arith.constant 0 : i32
    %c0_i32_0 = arith.constant 0 : i32
    %c0_i32_1 = arith.constant 0 : i32
    return %c0_i32, %c0_i32_0 : i32, i32
  }
  func.func @transform_2(%arg0: i32) -> (i32, i32) {
    %c0_i32 = arith.constant 0 : i32
    %c0_i32_0 = arith.constant 0 : i32
    %c0_i32_1 = arith.constant 0 : i32
    return %c0_i32, %c0_i32_0 : i32, i32
  }
  func.func @transform_3(%arg0: i32) -> (i32, i32) {
    %c0_i32 = arith.constant 0 : i32
    %c0_i32_0 = arith.constant 0 : i32
    %c0_i32_1 = arith.constant 0 : i32
    return %c0_i32, %c0_i32_0 : i32, i32
  }
  func.func @transform_4(%arg0: i32) -> (i32, i32) {
    %c0_i32 = arith.constant 0 : i32
    %c0_i32_0 = arith.constant 0 : i32
    %c0_i32_1 = arith.constant 0 : i32
    return %c0_i32, %c0_i32_0 : i32, i32
  }
  func.func @transform_5(%arg0: i32) -> (i32, i32) {
    %c0_i32 = arith.constant 0 : i32
    %c0_i32_0 = arith.constant 0 : i32
    %c0_i32_1 = arith.constant 0 : i32
    return %c0_i32, %c0_i32_0 : i32, i32
  }
  func.func @transform_6(%arg0: i32) -> (i32, i32) {
    %c0_i32 = arith.constant 0 : i32
    %c0_i32_0 = arith.constant 0 : i32
    %c0_i32_1 = arith.constant 0 : i32
    return %c0_i32, %c0_i32_0 : i32, i32
  }
  func.func @transform_7(%arg0: i32) -> (i32, i32) {
    %c0_i32 = arith.constant 0 : i32
    %c0_i32_0 = arith.constant 0 : i32
    %c0_i32_1 = arith.constant 0 : i32
    return %c0_i32, %c0_i32_0 : i32, i32
  }
  func.func @transform_8(%arg0: i32) -> (i32, i32) {
    %c0_i32 = arith.constant 0 : i32
    %c0_i32_0 = arith.constant 0 : i32
    %c0_i32_1 = arith.constant 0 : i32
    return %c0_i32, %c0_i32_0 : i32, i32
  }
  func.func @transform_9(%arg0: i32) -> (i32, i32) {
    %c0_i32 = arith.constant 0 : i32
    %c0_i32_0 = arith.constant 0 : i32
    return %arg0, %c0_i32 : i32, i32
  }
}

</mosaic_0001>

<llo_original>
// kernel: tpu_custom_call.1
$region0: #{tpu_custom_call.1}
  #allocation0 [shape = 'u32[]', space=smem, size = 0x4, offset = 0x4, fixed_abs, tag = 'smem constant byte address 0x4 - core index']
  #allocation1 [shape = 'u32[144,128]{1,0:T(1,128)}', space=vmem, size = 0x12000, scoped, tag = 'internal scratch']
  %s0 = inlined_call_operand.vmem [shape: f32[8,32], index: 0, kind: input, shape index: {}]
  %s1 = inlined_call_operand.vmem [shape: f32[32,16], index: 1, kind: input, shape index: {}]
  %s2 = inlined_call_operand.vmem [shape: f32[1,16], index: 2, kind: input, shape index: {}]
  %s3 = inlined_call_operand.vmem [shape: f32[16,16], index: 3, kind: input, shape index: {}]
  %s4 = inlined_call_operand.vmem [shape: f32[1,16], index: 4, kind: input, shape index: {}]
  %s5 = inlined_call_operand.vmem [shape: f32[16,16], index: 5, kind: input, shape index: {}]
  %s6 = inlined_call_operand.vmem [shape: f32[1,16], index: 6, kind: input, shape index: {}]
  %s7 = inlined_call_operand.vmem [shape: f32[16,8], index: 7, kind: input, shape index: {}]
  %s8 = inlined_call_operand.vmem [shape: f32[1,8], index: 8, kind: input, shape index: {}]
  %s9 = inlined_call_operand.hbm [shape: f32[8,8], index: 9, kind: output, shape index: {}]
  %s10 = sld [smem:[#allocation0]]
  $region46: #{tpu_custom_call.1} parent=0
    _
  %s12 = ssub.s32 1, %s10
  %s13 = scalar_select 0, %s12, %s10
  $region1: #{tpu_custom_call.1} parent=0
    #allocation2 [shape = 'u8[4096]{0}', space=vmem, size = 0x1000, scoped, tag = 'output window, operand 0, single buffered']
    #allocation3 [shape = 's32[1]{0}', space=sflag, size = 0x4, scoped, tag = 'scoped memory for tpu_custom_call.1']
    %14 = vsyncpa [#allocation3], 0
    // Predicated region
    $region2: #{tpu_custom_call.1} parent=1 // pred_check
      _
    $region3: #{tpu_custom_call.1} parent=1 // pred_check_branch
      %16 = sbr.rel (0) target = $region5
    $region4: #{tpu_custom_call.1} parent=1 // pred_region
      _
    $region5: #{tpu_custom_call.1} parent=1 // pred_fallthru
      _
    // Predicated region
    $region6: #{tpu_custom_call.1} parent=1 // pred_check
      _
    $region7: #{tpu_custom_call.1} parent=1 // pred_check_branch
      %18 = sbr.rel (0) target = $region9
    $region8: #{tpu_custom_call.1} parent=1 // pred_region
      _
    $region9: #{tpu_custom_call.1} parent=1 // pred_fallthru
      _
    // Predicated region
    $region10: #{tpu_custom_call.1} parent=1 // pred_check
      _
    $region11: #{tpu_custom_call.1} parent=1 // pred_check_branch
      %20 = sbr.rel (0) target = $region13
    $region12: #{tpu_custom_call.1} parent=1 // pred_region
      _
    $region13: #{tpu_custom_call.1} parent=1 // pred_fallthru
      _
    // Predicated region
    $region14: #{tpu_custom_call.1} parent=1 // pred_check
      _
    $region15: #{tpu_custom_call.1} parent=1 // pred_check_branch
      %22 = sbr.rel (0) target = $region17
    $region16: #{tpu_custom_call.1} parent=1 // pred_region
      _
    $region17: #{tpu_custom_call.1} parent=1 // pred_fallthru
      _
    // Predicated region
    $region18: #{tpu_custom_call.1} parent=1 // pred_check
      _
    $region19: #{tpu_custom_call.1} parent=1 // pred_check_branch
      %24 = sbr.rel (0) target = $region21
    $region20: #{tpu_custom_call.1} parent=1 // pred_region
      _
    $region21: #{tpu_custom_call.1} parent=1 // pred_fallthru
      _
    // Predicated region
    $region22: #{tpu_custom_call.1} parent=1 // pred_check
      _
    $region23: #{tpu_custom_call.1} parent=1 // pred_check_branch
      %26 = sbr.rel (0) target = $region25
    $region24: #{tpu_custom_call.1} parent=1 // pred_region
      _
    $region25: #{tpu_custom_call.1} parent=1 // pred_fallthru
      _
    // Predicated region
    $region26: #{tpu_custom_call.1} parent=1 // pred_check
      _
    $region27: #{tpu_custom_call.1} parent=1 // pred_check_branch
      %28 = sbr.rel (0) target = $region29
    $region28: #{tpu_custom_call.1} parent=1 // pred_region
      _
    $region29: #{tpu_custom_call.1} parent=1 // pred_fallthru
      _
    // Predicated region
    $region30: #{tpu_custom_call.1} parent=1 // pred_check
      _
    $region31: #{tpu_custom_call.1} parent=1 // pred_check_branch
      %30 = sbr.rel (0) target = $region33
    $region32: #{tpu_custom_call.1} parent=1 // pred_region
      _
    $region33: #{tpu_custom_call.1} parent=1 // pred_fallthru
      _
    // Predicated region
    $region34: #{tpu_custom_call.1} parent=1 // pred_check
      _
    $region35: #{tpu_custom_call.1} parent=1 // pred_check_branch
      %32 = sbr.rel (0) target = $region37
    $region36: #{tpu_custom_call.1} parent=1 // pred_region
      _
    $region37: #{tpu_custom_call.1} parent=1 // pred_fallthru
      _
    %v33 = vld [vmem:[%s0] sm:$0xff]
    %v34 = vld [vmem:[%s1] sm:$0xff]
    %v35 = vld [vmem:[%s1 + $0x8] sm:$0xff]
    %v36 = vld [vmem:[%s1 + $0x10] sm:$0xff]
    %v37 = vld [vmem:[%s1 + $0x18] sm:$0xff]
    %v38 = vld [vmem:[%s2] sm:$0x1]
    %v40 = vlaneseq
    %v41 = vshrl.u32 %v40, 7
    %v42 = vsub.s32 0, %v41
    %v43 = vrot.slane %v38, %v42
    %vm45 = vcmask 261120
    %v47 = vsel %vm45, %v33, 0
    %49 = vmatprep.subr.mxu0 0.0
    %50 = vmatpush1.msra.mxu0 0.0
    %51 = vmatprep.subr.mxu0 0.0
    %52 = vmatpush1.msra.mxu0 0.0
    %53 = vmatprep.subr.mxu0 0.0
    %54 = vmatpush1.msra.mxu0 0.0
    %55 = vmatprep.subr.mxu0 0.0
    %56 = vmatpush1.msra.mxu0 0.0
    %57 = vmatprep.subr.mxu0 0.0
    %58 = vmatpush1.msra.mxu0 0.0
    %59 = vmatprep.subr.mxu0 0.0
    %60 = vmatpush1.msra.mxu0 0.0
    %61 = vmatprep.subr.mxu0 0.0
    %62 = vmatpush1.msra.mxu0 0.0
    %63 = vmatprep.subr.mxu0 0.0
    %64 = vmatpush1.msra.mxu0 0.0
    %65 = vmatprep.subr.mxu0 0.0
    %66 = vmatpush1.msra.mxu0 0.0
    %67 = vmatprep.subr.mxu0 0.0
    %68 = vmatpush1.msra.mxu0 0.0
    %69 = vmatprep.subr.mxu0 0.0
    %70 = vmatpush1.msra.mxu0 0.0
    %71 = vmatprep.subr.mxu0 0.0
    %72 = vmatpush1.msra.mxu0 0.0
    %73 = vmatprep.subr.mxu0 0.0
    %74 = vmatpush1.msra.mxu0 %v37
    %75 = vmatprep.subr.mxu0 0.0
    %76 = vmatpush1.msra.mxu0 %v36
    %77 = vmatprep.subr.mxu0 0.0
    %78 = vmatpush1.msra.mxu0 %v35
    %79 = vmatprep.subr.mxu0 0.0
    %80 = vmatpush1.msra.mxu0 %v34
    %81 = vmatprep.subr.mxu0 0.0
    %82 = vmatpush2.msra.mxu0 0.0
    %83 = vmatprep.subr.mxu0 0.0
    %84 = vmatpush2.msra.mxu0 0.0
    %85 = vmatprep.subr.mxu0 0.0
    %86 = vmatpush2.msra.mxu0 0.0
    %87 = vmatprep.subr.mxu0 0.0
    %88 = vmatpush2.msra.mxu0 0.0
    %89 = vmatprep.subr.mxu0 0.0
    %90 = vmatpush2.msra.mxu0 0.0
    %91 = vmatprep.subr.mxu0 0.0
    %92 = vmatpush2.msra.mxu0 0.0
    %93 = vmatprep.subr.mxu0 0.0
    %94 = vmatpush2.msra.mxu0 0.0
    %95 = vmatprep.subr.mxu0 0.0
    %96 = vmatpush2.msra.mxu0 0.0
    %97 = vmatprep.subr.mxu0 0.0
    %98 = vmatpush2.msra.mxu0 0.0
    %99 = vmatprep.subr.mxu0 0.0
    %100 = vmatpush2.msra.mxu0 0.0
    %101 = vmatprep.subr.mxu0 0.0
    %102 = vmatpush2.msra.mxu0 0.0
    %103 = vmatprep.subr.mxu0 0.0
    %104 = vmatpush2.msra.mxu0 0.0
    %105 = vmatprep.subr.mxu0 0.0
    %106 = vmatpush2.msra.mxu0 0.0
    %107 = vmatprep.subr.mxu0 0.0
    %108 = vmatpush2.msra.mxu0 0.0
    %109 = vmatprep.subr.mxu0 0.0
    %110 = vmatpush2.msra.mxu0 0.0
    %111 = vmatprep.subr.mxu0 0.0
    %112 = vmatpush2.msra.mxu0 0.0
    %113 = vmatprep.mubr.f32.mxu0 0.0
    %114 = vmatmul.mubr.f32.gmra.mxu0 %v47
    %v115 = vpop.f32.mrf.mxu0
    %v116 = vadd.f32 %v43, %v115
    %v117 = vpop.f32.mrf.mxu0
    %118 = vdwg.mxu0
    %v119 = vmax.f32 %v116, 0.0
    %v120 = vld [vmem:[%s3] sm:$0xff]
    %v121 = vld [vmem:[%s3 + $0x8] sm:$0xff]
    %v122 = vld [vmem:[%s4] sm:$0x1]
    %v124 = vlaneseq
    %v125 = vshrl.u32 %v124, 7
    %v126 = vsub.s32 0, %v125
    %v127 = vrot.slane %v122, %v126
    %vm129 = vcmask 130048
    %v131 = vsel %vm129, %v119, 0
    %133 = vmatprep.subr.mxu0 0.0
    %134 = vmatpush1.msra.mxu0 0.0
    %135 = vmatprep.subr.mxu0 0.0
    %136 = vmatpush1.msra.mxu0 0.0
    %137 = vmatprep.subr.mxu0 0.0
    %138 = vmatpush1.msra.mxu0 0.0
    %139 = vmatprep.subr.mxu0 0.0
    %140 = vmatpush1.msra.mxu0 0.0
    %141 = vmatprep.subr.mxu0 0.0
    %142 = vmatpush1.msra.mxu0 0.0
    %143 = vmatprep.subr.mxu0 0.0
    %144 = vmatpush1.msra.mxu0 0.0
    %145 = vmatprep.subr.mxu0 0.0
    %146 = vmatpush1.msra.mxu0 0.0
    %147 = vmatprep.subr.mxu0 0.0
    %148 = vmatpush1.msra.mxu0 0.0
    %149 = vmatprep.subr.mxu0 0.0
    %150 = vmatpush1.msra.mxu0 0.0
    %151 = vmatprep.subr.mxu0 0.0
    %152 = vmatpush1.msra.mxu0 0.0
    %153 = vmatprep.subr.mxu0 0.0
    %154 = vmatpush1.msra.mxu0 0.0
    %155 = vmatprep.subr.mxu0 0.0
    %156 = vmatpush1.msra.mxu0 0.0
    %157 = vmatprep.subr.mxu0 0.0
    %158 = vmatpush1.msra.mxu0 0.0
    %159 = vmatprep.subr.mxu0 0.0
    %160 = vmatpush1.msra.mxu0 0.0
    %161 = vmatprep.subr.mxu0 0.0
    %162 = vmatpush1.msra.mxu0 %v121
    %163 = vmatprep.subr.mxu0 0.0
    %164 = vmatpush1.msra.mxu0 %v120
    %165 = vmatprep.subr.mxu0 0.0
    %166 = vmatpush2.msra.mxu0 0.0
    %167 = vmatprep.subr.mxu0 0.0
    %168 = vmatpush2.msra.mxu0 0.0
    %169 = vmatprep.subr.mxu0 0.0
    %170 = vmatpush2.msra.mxu0 0.0
    %171 = vmatprep.subr.mxu0 0.0
    %172 = vmatpush2.msra.mxu0 0.0
    %173 = vmatprep.subr.mxu0 0.0
    %174 = vmatpush2.msra.mxu0 0.0
    %175 = vmatprep.subr.mxu0 0.0
    %176 = vmatpush2.msra.mxu0 0.0
    %177 = vmatprep.subr.mxu0 0.0
    %178 = vmatpush2.msra.mxu0 0.0
    %179 = vmatprep.subr.mxu0 0.0
    %180 = vmatpush2.msra.mxu0 0.0
    %181 = vmatprep.subr.mxu0 0.0
    %182 = vmatpush2.msra.mxu0 0.0
    %183 = vmatprep.subr.mxu0 0.0
    %184 = vmatpush2.msra.mxu0 0.0
    %185 = vmatprep.subr.mxu0 0.0
    %186 = vmatpush2.msra.mxu0 0.0
    %187 = vmatprep.subr.mxu0 0.0
    %188 = vmatpush2.msra.mxu0 0.0
    %189 = vmatprep.subr.mxu0 0.0
    %190 = vmatpush2.msra.mxu0 0.0
    %191 = vmatprep.subr.mxu0 0.0
    %192 = vmatpush2.msra.mxu0 0.0
    %193 = vmatprep.subr.mxu0 0.0
    %194 = vmatpush2.msra.mxu0 0.0
    %195 = vmatprep.subr.mxu0 0.0
    %196 = vmatpush2.msra.mxu0 0.0
    %197 = vmatprep.mubr.f32.mxu0 0.0
    %198 = vmatmul.mubr.f32.gmra.mxu0 %v131
    %v199 = vpop.f32.mrf.mxu0
    %v200 = vadd.f32 %v127, %v199
    %v201 = vpop.f32.mrf.mxu0
    %202 = vdwg.mxu0
    %v203 = vmax.f32 %v200, 0.0
    %v204 = vld [vmem:[%s5] sm:$0xff]
    %v205 = vld [vmem:[%s5 + $0x8] sm:$0xff]
    %v206 = vld [vmem:[%s6] sm:$0x1]
    %v208 = vlaneseq
    %v209 = vshrl.u32 %v208, 7
    %v210 = vsub.s32 0, %v209
    %v211 = vrot.slane %v206, %v210
    %v214 = vsel %vm129, %v203, 0
    %216 = vmatprep.subr.mxu0 0.0
    %217 = vmatpush1.msra.mxu0 0.0
    %218 = vmatprep.subr.mxu0 0.0
    %219 = vmatpush1.msra.mxu0 0.0
    %220 = vmatprep.subr.mxu0 0.0
    %221 = vmatpush1.msra.mxu0 0.0
    %222 = vmatprep.subr.mxu0 0.0
    %223 = vmatpush1.msra.mxu0 0.0
    %224 = vmatprep.subr.mxu0 0.0
    %225 = vmatpush1.msra.mxu0 0.0
    %226 = vmatprep.subr.mxu0 0.0
    %227 = vmatpush1.msra.mxu0 0.0
    %228 = vmatprep.subr.mxu0 0.0
    %229 = vmatpush1.msra.mxu0 0.0
    %230 = vmatprep.subr.mxu0 0.0
    %231 = vmatpush1.msra.mxu0 0.0
    %232 = vmatprep.subr.mxu0 0.0
    %233 = vmatpush1.msra.mxu0 0.0
    %234 = vmatprep.subr.mxu0 0.0
    %235 = vmatpush1.msra.mxu0 0.0
    %236 = vmatprep.subr.mxu0 0.0
    %237 = vmatpush1.msra.mxu0 0.0
    %238 = vmatprep.subr.mxu0 0.0
    %239 = vmatpush1.msra.mxu0 0.0
    %240 = vmatprep.subr.mxu0 0.0
    %241 = vmatpush1.msra.mxu0 0.0
    %242 = vmatprep.subr.mxu0 0.0
    %243 = vmatpush1.msra.mxu0 0.0
    %244 = vmatprep.subr.mxu0 0.0
    %245 = vmatpush1.msra.mxu0 %v205
    %246 = vmatprep.subr.mxu0 0.0
    %247 = vmatpush1.msra.mxu0 %v204
    %248 = vmatprep.subr.mxu0 0.0
    %249 = vmatpush2.msra.mxu0 0.0
    %250 = vmatprep.subr.mxu0 0.0
    %251 = vmatpush2.msra.mxu0 0.0
    %252 = vmatprep.subr.mxu0 0.0
    %253 = vmatpush2.msra.mxu0 0.0
    %254 = vmatprep.subr.mxu0 0.0
    %255 = vmatpush2.msra.mxu0 0.0
    %256 = vmatprep.subr.mxu0 0.0
    %257 = vmatpush2.msra.mxu0 0.0
    %258 = vmatprep.subr.mxu0 0.0
    %259 = vmatpush2.msra.mxu0 0.0
    %260 = vmatprep.subr.mxu0 0.0
    %261 = vmatpush2.msra.mxu0 0.0
    %262 = vmatprep.subr.mxu0 0.0
    %263 = vmatpush2.msra.mxu0 0.0
    %264 = vmatprep.subr.mxu0 0.0
    %265 = vmatpush2.msra.mxu0 0.0
    %266 = vmatprep.subr.mxu0 0.0
    %267 = vmatpush2.msra.mxu0 0.0
    %268 = vmatprep.subr.mxu0 0.0
    %269 = vmatpush2.msra.mxu0 0.0
    %270 = vmatprep.subr.mxu0 0.0
    %271 = vmatpush2.msra.mxu0 0.0
    %272 = vmatprep.subr.mxu0 0.0
    %273 = vmatpush2.msra.mxu0 0.0
    %274 = vmatprep.subr.mxu0 0.0
    %275 = vmatpush2.msra.mxu0 0.0
    %276 = vmatprep.subr.mxu0 0.0
    %277 = vmatpush2.msra.mxu0 0.0
    %278 = vmatprep.subr.mxu0 0.0
    %279 = vmatpush2.msra.mxu0 0.0
    %280 = vmatprep.mubr.f32.mxu0 0.0
    %281 = vmatmul.mubr.f32.gmra.mxu0 %v214
    %v282 = vpop.f32.mrf.mxu0
    %v283 = vadd.f32 %v211, %v282
    %v284 = vpop.f32.mrf.mxu0
    %285 = vdwg.mxu0
    %v286 = vmax.f32 %v283, 0.0
    %v287 = vld [vmem:[%s7] sm:$0xff]
    %v288 = vld [vmem:[%s7 + $0x8] sm:$0xff]
    %v289 = vld [vmem:[%s8] sm:$0x1]
    %v291 = vlaneseq
    %v292 = vshrl.u32 %v291, 7
    %v293 = vsub.s32 0, %v292
    %v294 = vrot.slane %v289, %v293
    %v297 = vsel %vm129, %v286, 0
    %299 = vmatprep.subr.mxu0 0.0
    %300 = vmatpush1.msra.mxu0 0.0
    %301 = vmatprep.subr.mxu0 0.0
    %302 = vmatpush1.msra.mxu0 0.0
    %303 = vmatprep.subr.mxu0 0.0
    %304 = vmatpush1.msra.mxu0 0.0
    %305 = vmatprep.subr.mxu0 0.0
    %306 = vmatpush1.msra.mxu0 0.0
    %307 = vmatprep.subr.mxu0 0.0
    %308 = vmatpush1.msra.mxu0 0.0
    %309 = vmatprep.subr.mxu0 0.0
    %310 = vmatpush1.msra.mxu0 0.0
    %311 = vmatprep.subr.mxu0 0.0
    %312 = vmatpush1.msra.mxu0 0.0
    %313 = vmatprep.subr.mxu0 0.0
    %314 = vmatpush1.msra.mxu0 0.0
    %315 = vmatprep.subr.mxu0 0.0
    %316 = vmatpush1.msra.mxu0 0.0
    %317 = vmatprep.subr.mxu0 0.0
    %318 = vmatpush1.msra.mxu0 0.0
    %319 = vmatprep.subr.mxu0 0.0
    %320 = vmatpush1.msra.mxu0 0.0
    %321 = vmatprep.subr.mxu0 0.0
    %322 = vmatpush1.msra.mxu0 0.0
    %323 = vmatprep.subr.mxu0 0.0
    %324 = vmatpush1.msra.mxu0 0.0
    %325 = vmatprep.subr.mxu0 0.0
    %326 = vmatpush1.msra.mxu0 0.0
    %327 = vmatprep.subr.mxu0 0.0
    %328 = vmatpush1.msra.mxu0 %v288
    %329 = vmatprep.subr.mxu0 0.0
    %330 = vmatpush1.msra.mxu0 %v287
    %331 = vmatprep.subr.mxu0 0.0
    %332 = vmatpush2.msra.mxu0 0.0
    %333 = vmatprep.subr.mxu0 0.0
    %334 = vmatpush2.msra.mxu0 0.0
    %335 = vmatprep.subr.mxu0 0.0
    %336 = vmatpush2.msra.mxu0 0.0
    %337 = vmatprep.subr.mxu0 0.0
    %338 = vmatpush2.msra.mxu0 0.0
    %339 = vmatprep.subr.mxu0 0.0
    %340 = vmatpush2.msra.mxu0 0.0
    %341 = vmatprep.subr.mxu0 0.0
    %342 = vmatpush2.msra.mxu0 0.0
    %343 = vmatprep.subr.mxu0 0.0
    %344 = vmatpush2.msra.mxu0 0.0
    %345 = vmatprep.subr.mxu0 0.0
    %346 = vmatpush2.msra.mxu0 0.0
    %347 = vmatprep.subr.mxu0 0.0
    %348 = vmatpush2.msra.mxu0 0.0
    %349 = vmatprep.subr.mxu0 0.0
    %350 = vmatpush2.msra.mxu0 0.0
    %351 = vmatprep.subr.mxu0 0.0
    %352 = vmatpush2.msra.mxu0 0.0
    %353 = vmatprep.subr.mxu0 0.0
    %354 = vmatpush2.msra.mxu0 0.0
    %355 = vmatprep.subr.mxu0 0.0
    %356 = vmatpush2.msra.mxu0 0.0
    %357 = vmatprep.subr.mxu0 0.0
    %358 = vmatpush2.msra.mxu0 0.0
    %359 = vmatprep.subr.mxu0 0.0
    %360 = vmatpush2.msra.mxu0 0.0
    %361 = vmatprep.subr.mxu0 0.0
    %362 = vmatpush2.msra.mxu0 0.0
    %363 = vmatprep.mubr.f32.mxu0 0.0
    %364 = vmatmul.mubr.f32.gmra.mxu0 %v297
    %v365 = vpop.f32.mrf.mxu0
    %v366 = vadd.f32 %v294, %v365
    %v367 = vpop.f32.mrf.mxu0
    %368 = vdwg.mxu0
    %vm369 = vcmask 64512
    %370 = vst.msk [vmem:[#allocation2] sm:$0xff] %vm369, %v366
    // Predicated region
    $region38: #{tpu_custom_call.1} parent=1 // pred_check
      _
    $region39: #{tpu_custom_call.1} parent=1 // pred_check_branch
      %372 = sbr.rel (0) target = $region41
    $region40: #{tpu_custom_call.1} parent=1 // pred_region
      %s374 = ssub.s32 128, 128
      %375 = vsyncadd [#allocation3], %s374
      %s377 = sshll.u32 [#allocation2], 4
      %s378 = int_to_ptr.vmem [resolvable:$true] %s377
      %380 = dma.vmem_to_hbm [thread:$0]  %s378, 128, %s9, [#allocation3]
    $region41: #{tpu_custom_call.1} parent=1 // pred_fallthru
      _
    // Predicated region
    $region42: #{tpu_custom_call.1} parent=1 // pred_check
      _
    $region43: #{tpu_custom_call.1} parent=1 // pred_check_branch
      %382 = sbr.rel (0) target = $region45
    $region44: #{tpu_custom_call.1} parent=1 // pred_region
      %383 = dma.done [#allocation3], 128
    $region45: #{tpu_custom_call.1} parent=1 // pred_fallthru
      _
    %384 = vsyncpa [#allocation3], 1

</llo_original>
